<compile_context>
chip_gen: v7x
topology: tpu7x:2x2x1
jax: 0.10.0
libtpu: 0.0.40
codegen_flags: <defaults>
</compile_context>

<pallas_src>
import functools

import jax
import jax.numpy as jnp
from jax.experimental import pallas as pl
from jax.experimental.pallas import tpu as pltpu


def _dice_partial_kernel(pred_ref, gt_ref, inter_ref, *, n_classes):
    # pred_ref: (1, C, H, TW) VMEM logits; gt_ref: (1, H, TW) VMEM
    # inter_ref: (1, C, TW) VMEM — per-(b, w)-column partials of inter_i
    gt = gt_ref[...].astype(jnp.float32)                    # (1, H, TW)

    def logit(i):
        return pred_ref[:, i, :, :].astype(jnp.float32)     # (1, H, TW)

    # ---- channel softmax (nn.Softmax(dim=1) on NCHW), unrolled over static C ----
    m = logit(0)
    for i in range(1, n_classes):
        m = jnp.maximum(m, logit(i))
    denom = jnp.exp(logit(0) - m)
    for i in range(1, n_classes):
        denom = denom + jnp.exp(logit(i) - m)
    inv_denom = pl.reciprocal(denom, approx=True)           # EUP, off the VALU

    for i in range(n_classes):
        # Recompute exp(l_i - m) per class instead of keeping C arrays live.
        p = jnp.exp(logit(i) - m) * inv_denom                # softmax_C(pred)[:, i] in [0, 1]

        # ---- PyTorch quirk: second Softmax(dim=1) on the 3-D slice == softmax over H ----
        # p in [0, 1] so exp(p) cannot overflow -> no max-subtraction needed.
        e2 = jnp.exp(p)                                      # (1, H, TW)
        s_e2 = jnp.sum(e2, axis=1, keepdims=True)            # (1, 1, TW)  = softmax denom
        s_gt = jnp.sum(e2 * gt, axis=1, keepdims=True)       # (1, 1, TW)
        # Per-column contribution to inter_i = sum(q * gt), with q = e2 / s_e2.
        r = s_gt * pl.reciprocal(s_e2, approx=True)          # (1, 1, TW)
        inter_ref[:, i:i + 1, :] = r


def _pick_tile_w(w_pad, c, h, budget_bytes=8 * 1024 * 1024):
    """Largest W tile (multiple of 128, dividing w_pad) whose double-buffered
    pred block (2 * C * H * tile_w * 4B) stays under ~budget."""
    per_lane = 2 * c * h * 4
    max_tw = max(128, (budget_bytes // per_lane) // 128 * 128)
    tw = min(w_pad, max_tw)
    while w_pad % tw:
        tw -= 128
    return int(tw)


def dice_loss(pred, gt, invalance, smooth):
    """pred: (B, C, H, W) logits, gt: (B, H, W), invalance: (C,) class weights."""
    B, C, H, W = pred.shape
    pred = pred.astype(jnp.float32)
    gt = gt.astype(jnp.float32)

    sum_gt = jnp.sum(gt)
    sum_q = jnp.float32(B * W)   # second softmax: each (b, w) column of q sums to 1

    # Pad W so the lane axis is dense (multiple of 128).  Padded columns have
    # gt == 0, so they contribute 0 to inter; Sum(q) is taken analytically above.
    w_pad = ((W + 127) // 128) * 128
    if w_pad != W:
        pred = jnp.pad(pred, ((0, 0), (0, 0), (0, 0), (0, w_pad - W)))
        gt_p = jnp.pad(gt, ((0, 0), (0, 0), (0, w_pad - W)))
    else:
        gt_p = gt

    tile_w = _pick_tile_w(w_pad, C, H)
    n_w = w_pad // tile_w

    kernel = functools.partial(_dice_partial_kernel, n_classes=int(C))
    inter_cols = pl.pallas_call(
        kernel,
        out_shape=jax.ShapeDtypeStruct((B, C, w_pad), jnp.float32),
        grid=(B, n_w),
        in_specs=[
            pl.BlockSpec((1, C, H, tile_w), lambda b, w: (b, 0, 0, w)),
            pl.BlockSpec((1, H, tile_w), lambda b, w: (b, 0, w)),
        ],
        out_specs=pl.BlockSpec((1, C, tile_w), lambda b, w: (b, 0, w)),
        compiler_params=pltpu.CompilerParams(
            dimension_semantics=("parallel", "parallel")),
    )(pred, gt_p)

    # Epilogue in the wrapper (keeps grid axes parallel / cross-core shardable).
    inter_c = jnp.sum(inter_cols, axis=(0, 2))               # (C,)
    union = sum_q + sum_gt
    smooth = jnp.float32(smooth)
    dice = 1.0 - (2.0 * inter_c + smooth) / (union + smooth)
    return jnp.sum(dice * invalance.astype(jnp.float32)) / jnp.float32(C)


def dice_loss_ref(pred, gt, invalance, smooth):
    """Pure-JAX reference mirroring the PyTorch module exactly."""
    p = jax.nn.softmax(pred.astype(jnp.float32), axis=1)
    gt = gt.astype(jnp.float32)
    n_classes = pred.shape[1]
    loss = jnp.float32(0.0)
    for i in range(n_classes):
        q = jax.nn.softmax(p[:, i, :, :], axis=1)   # second softmax over H (dim=1 of 3-D)
        inter = jnp.sum(q * gt)
        union = jnp.sum(q) + jnp.sum(gt)
        loss = loss + (1.0 - (2.0 * inter + smooth) / (union + smooth)) * invalance[i]
    return loss / n_classes


if __name__ == "__main__":
    B, C, H, W = 2, 4, 16, 16
    smooth = 1e-5

    key = jax.random.PRNGKey(0)
    k1, k2 = jax.random.split(key)
    pred = jax.random.normal(k1, (B, C, H, W), dtype=jnp.float32)
    gt = (jax.random.uniform(k2, (B, H, W)) < 0.5).astype(jnp.float32)
    # deterministic "invalance" class weights (module __init__ arg)
    invalance = jnp.array([0.4, 0.3, 0.2, 0.1], dtype=jnp.float32)

    dice_fn = jax.jit(functools.partial(dice_loss, smooth=smooth))
    out = jax.block_until_ready(dice_fn(pred, gt, invalance))
    ref = dice_loss_ref(pred, gt, invalance, smooth)
    # approx EUP reciprocals + analytic Sum(q) perturb low-order bits only.
    assert jnp.allclose(out, ref, rtol=5e-3, atol=1e-4), (out, ref)
    print("KERNEL_OK")
</pallas_src>

<mosaic_0001>
module attributes {stable_mosaic.version = 11 : i64} {
  func.func @_dice_partial_kernel(%arg0: i32, %arg1: i32, %arg2: memref<1x4x16x128xf32, #tpu.memory_space<vmem>>, %arg3: memref<1x16x128xf32, #tpu.memory_space<vmem>>, %arg4: memref<1x4x128xf32, #tpu.memory_space<vmem>>) attributes {dimension_semantics = [#tpu.dimension_semantics<parallel>, #tpu.dimension_semantics<parallel>], iteration_bounds = array<i64: 2, 1>, scalar_prefetch = 0 : i64, scratch_operands = 0 : i64, tpu.core_type = #tpu.core_type<tc>, window_params = [{transform_indices = @transform_0, window_bounds = array<i64: 1, 4, 16, 128>}, {transform_indices = @transform_1, window_bounds = array<i64: 1, 16, 128>}, {transform_indices = @transform_2, window_bounds = array<i64: 1, 4, 128>}]} {
    %c0 = arith.constant 0 : index
    %c0_0 = arith.constant 0 : index
    %c0_1 = arith.constant 0 : index
    %0 = vector.load %arg3[%c0, %c0_0, %c0_1] : memref<1x16x128xf32, #tpu.memory_space<vmem>>, vector<1x16x128xf32>
    %c0_2 = arith.constant 0 : index
    %c0_3 = arith.constant 0 : index
    %c0_4 = arith.constant 0 : index
    %c0_5 = arith.constant 0 : index
    %1 = vector.load %arg2[%c0_2, %c0_3, %c0_4, %c0_5] : memref<1x4x16x128xf32, #tpu.memory_space<vmem>>, vector<1x1x16x128xf32>
    %2 = vector.shape_cast %1 : vector<1x1x16x128xf32> to vector<1x16x128xf32>
    %c0_6 = arith.constant 0 : index
    %c1 = arith.constant 1 : index
    %c0_7 = arith.constant 0 : index
    %c0_8 = arith.constant 0 : index
    %3 = vector.load %arg2[%c0_6, %c1, %c0_7, %c0_8] : memref<1x4x16x128xf32, #tpu.memory_space<vmem>>, vector<1x1x16x128xf32>
    %4 = vector.shape_cast %3 : vector<1x1x16x128xf32> to vector<1x16x128xf32>
    %5 = arith.maximumf %2, %4 : vector<1x16x128xf32>
    %c0_9 = arith.constant 0 : index
    %c2 = arith.constant 2 : index
    %c0_10 = arith.constant 0 : index
    %c0_11 = arith.constant 0 : index
    %6 = vector.load %arg2[%c0_9, %c2, %c0_10, %c0_11] : memref<1x4x16x128xf32, #tpu.memory_space<vmem>>, vector<1x1x16x128xf32>
    %7 = vector.shape_cast %6 : vector<1x1x16x128xf32> to vector<1x16x128xf32>
    %8 = arith.maximumf %5, %7 : vector<1x16x128xf32>
    %c0_12 = arith.constant 0 : index
    %c3 = arith.constant 3 : index
    %c0_13 = arith.constant 0 : index
    %c0_14 = arith.constant 0 : index
    %9 = vector.load %arg2[%c0_12, %c3, %c0_13, %c0_14] : memref<1x4x16x128xf32, #tpu.memory_space<vmem>>, vector<1x1x16x128xf32>
    %10 = vector.shape_cast %9 : vector<1x1x16x128xf32> to vector<1x16x128xf32>
    %11 = arith.maximumf %8, %10 : vector<1x16x128xf32>
    %c0_15 = arith.constant 0 : index
    %c0_16 = arith.constant 0 : index
    %c0_17 = arith.constant 0 : index
    %c0_18 = arith.constant 0 : index
    %12 = vector.load %arg2[%c0_15, %c0_16, %c0_17, %c0_18] : memref<1x4x16x128xf32, #tpu.memory_space<vmem>>, vector<1x1x16x128xf32>
    %13 = vector.shape_cast %12 : vector<1x1x16x128xf32> to vector<1x16x128xf32>
    %14 = arith.subf %13, %11 : vector<1x16x128xf32>
    %15 = math.exp %14 : vector<1x16x128xf32>
    %c0_19 = arith.constant 0 : index
    %c1_20 = arith.constant 1 : index
    %c0_21 = arith.constant 0 : index
    %c0_22 = arith.constant 0 : index
    %16 = vector.load %arg2[%c0_19, %c1_20, %c0_21, %c0_22] : memref<1x4x16x128xf32, #tpu.memory_space<vmem>>, vector<1x1x16x128xf32>
    %17 = vector.shape_cast %16 : vector<1x1x16x128xf32> to vector<1x16x128xf32>
    %18 = arith.subf %17, %11 : vector<1x16x128xf32>
    %19 = math.exp %18 : vector<1x16x128xf32>
    %20 = arith.addf %15, %19 : vector<1x16x128xf32>
    %c0_23 = arith.constant 0 : index
    %c2_24 = arith.constant 2 : index
    %c0_25 = arith.constant 0 : index
    %c0_26 = arith.constant 0 : index
    %21 = vector.load %arg2[%c0_23, %c2_24, %c0_25, %c0_26] : memref<1x4x16x128xf32, #tpu.memory_space<vmem>>, vector<1x1x16x128xf32>
    %22 = vector.shape_cast %21 : vector<1x1x16x128xf32> to vector<1x16x128xf32>
    %23 = arith.subf %22, %11 : vector<1x16x128xf32>
    %24 = math.exp %23 : vector<1x16x128xf32>
    %25 = arith.addf %20, %24 : vector<1x16x128xf32>
    %c0_27 = arith.constant 0 : index
    %c3_28 = arith.constant 3 : index
    %c0_29 = arith.constant 0 : index
    %c0_30 = arith.constant 0 : index
    %26 = vector.load %arg2[%c0_27, %c3_28, %c0_29, %c0_30] : memref<1x4x16x128xf32, #tpu.memory_space<vmem>>, vector<1x1x16x128xf32>
    %27 = vector.shape_cast %26 : vector<1x1x16x128xf32> to vector<1x16x128xf32>
    %28 = arith.subf %27, %11 : vector<1x16x128xf32>
    %29 = math.exp %28 : vector<1x16x128xf32>
    %30 = arith.addf %25, %29 : vector<1x16x128xf32>
    %31 = tpu.reciprocal %30 {approx = true} : vector<1x16x128xf32> -> vector<1x16x128xf32>
    %c0_31 = arith.constant 0 : index
    %c0_32 = arith.constant 0 : index
    %c0_33 = arith.constant 0 : index
    %c0_34 = arith.constant 0 : index
    %32 = vector.load %arg2[%c0_31, %c0_32, %c0_33, %c0_34] : memref<1x4x16x128xf32, #tpu.memory_space<vmem>>, vector<1x1x16x128xf32>
    %33 = vector.shape_cast %32 : vector<1x1x16x128xf32> to vector<1x16x128xf32>
    %34 = arith.subf %33, %11 : vector<1x16x128xf32>
    %35 = math.exp %34 : vector<1x16x128xf32>
    %36 = arith.mulf %35, %31 : vector<1x16x128xf32>
    %37 = math.exp %36 : vector<1x16x128xf32>
    %cst = arith.constant dense<0.000000e+00> : vector<1x128xf32>
    %38 = vector.multi_reduction <add>, %37, %cst [1] : vector<1x16x128xf32> to vector<1x128xf32>
    %39 = vector.shape_cast %38 : vector<1x128xf32> to vector<1x1x128xf32>
    %40 = arith.mulf %37, %0 : vector<1x16x128xf32>
    %cst_35 = arith.constant dense<0.000000e+00> : vector<1x128xf32>
    %41 = vector.multi_reduction <add>, %40, %cst_35 [1] : vector<1x16x128xf32> to vector<1x128xf32>
    %42 = vector.shape_cast %41 : vector<1x128xf32> to vector<1x1x128xf32>
    %43 = tpu.reciprocal %39 {approx = true} : vector<1x1x128xf32> -> vector<1x1x128xf32>
    %44 = arith.mulf %42, %43 : vector<1x1x128xf32>
    %c0_36 = arith.constant 0 : index
    %c0_37 = arith.constant 0 : index
    %c0_38 = arith.constant 0 : index
    %45 = vector.load %arg4[%c0_36, %c0_37, %c0_38] : memref<1x4x128xf32, #tpu.memory_space<vmem>>, vector<1x1x128xf32>
    tpu.vector_store %arg4[%c0_36, %c0_37, %c0_38], %44 {strides = array<i32>} : memref<1x4x128xf32, #tpu.memory_space<vmem>>, vector<1x1x128xf32>,
    %c0_39 = arith.constant 0 : index
    %c1_40 = arith.constant 1 : index
    %c0_41 = arith.constant 0 : index
    %c0_42 = arith.constant 0 : index
    %46 = vector.load %arg2[%c0_39, %c1_40, %c0_41, %c0_42] : memref<1x4x16x128xf32, #tpu.memory_space<vmem>>, vector<1x1x16x128xf32>
    %47 = vector.shape_cast %46 : vector<1x1x16x128xf32> to vector<1x16x128xf32>
    %48 = arith.subf %47, %11 : vector<1x16x128xf32>
    %49 = math.exp %48 : vector<1x16x128xf32>
    %50 = arith.mulf %49, %31 : vector<1x16x128xf32>
    %51 = math.exp %50 : vector<1x16x128xf32>
    %cst_43 = arith.constant dense<0.000000e+00> : vector<1x128xf32>
    %52 = vector.multi_reduction <add>, %51, %cst_43 [1] : vector<1x16x128xf32> to vector<1x128xf32>
    %53 = vector.shape_cast %52 : vector<1x128xf32> to vector<1x1x128xf32>
    %54 = arith.mulf %51, %0 : vector<1x16x128xf32>
    %cst_44 = arith.constant dense<0.000000e+00> : vector<1x128xf32>
    %55 = vector.multi_reduction <add>, %54, %cst_44 [1] : vector<1x16x128xf32> to vector<1x128xf32>
    %56 = vector.shape_cast %55 : vector<1x128xf32> to vector<1x1x128xf32>
    %57 = tpu.reciprocal %53 {approx = true} : vector<1x1x128xf32> -> vector<1x1x128xf32>
    %58 = arith.mulf %56, %57 : vector<1x1x128xf32>
    %c0_45 = arith.constant 0 : index
    %c1_46 = arith.constant 1 : index
    %c0_47 = arith.constant 0 : index
    %59 = vector.load %arg4[%c0_45, %c1_46, %c0_47] : memref<1x4x128xf32, #tpu.memory_space<vmem>>, vector<1x1x128xf32>
    tpu.vector_store %arg4[%c0_45, %c1_46, %c0_47], %58 {strides = array<i32>} : memref<1x4x128xf32, #tpu.memory_space<vmem>>, vector<1x1x128xf32>,
    %c0_48 = arith.constant 0 : index
    %c2_49 = arith.constant 2 : index
    %c0_50 = arith.constant 0 : index
    %c0_51 = arith.constant 0 : index
    %60 = vector.load %arg2[%c0_48, %c2_49, %c0_50, %c0_51] : memref<1x4x16x128xf32, #tpu.memory_space<vmem>>, vector<1x1x16x128xf32>
    %61 = vector.shape_cast %60 : vector<1x1x16x128xf32> to vector<1x16x128xf32>
    %62 = arith.subf %61, %11 : vector<1x16x128xf32>
    %63 = math.exp %62 : vector<1x16x128xf32>
    %64 = arith.mulf %63, %31 : vector<1x16x128xf32>
    %65 = math.exp %64 : vector<1x16x128xf32>
    %cst_52 = arith.constant dense<0.000000e+00> : vector<1x128xf32>
    %66 = vector.multi_reduction <add>, %65, %cst_52 [1] : vector<1x16x128xf32> to vector<1x128xf32>
    %67 = vector.shape_cast %66 : vector<1x128xf32> to vector<1x1x128xf32>
    %68 = arith.mulf %65, %0 : vector<1x16x128xf32>
    %cst_53 = arith.constant dense<0.000000e+00> : vector<1x128xf32>
    %69 = vector.multi_reduction <add>, %68, %cst_53 [1] : vector<1x16x128xf32> to vector<1x128xf32>
    %70 = vector.shape_cast %69 : vector<1x128xf32> to vector<1x1x128xf32>
    %71 = tpu.reciprocal %67 {approx = true} : vector<1x1x128xf32> -> vector<1x1x128xf32>
    %72 = arith.mulf %70, %71 : vector<1x1x128xf32>
    %c0_54 = arith.constant 0 : index
    %c2_55 = arith.constant 2 : index
    %c0_56 = arith.constant 0 : index
    %73 = vector.load %arg4[%c0_54, %c2_55, %c0_56] : memref<1x4x128xf32, #tpu.memory_space<vmem>>, vector<1x1x128xf32>
    tpu.vector_store %arg4[%c0_54, %c2_55, %c0_56], %72 {strides = array<i32>} : memref<1x4x128xf32, #tpu.memory_space<vmem>>, vector<1x1x128xf32>,
    %c0_57 = arith.constant 0 : index
    %c3_58 = arith.constant 3 : index
    %c0_59 = arith.constant 0 : index
    %c0_60 = arith.constant 0 : index
    %74 = vector.load %arg2[%c0_57, %c3_58, %c0_59, %c0_60] : memref<1x4x16x128xf32, #tpu.memory_space<vmem>>, vector<1x1x16x128xf32>
    %75 = vector.shape_cast %74 : vector<1x1x16x128xf32> to vector<1x16x128xf32>
    %76 = arith.subf %75, %11 : vector<1x16x128xf32>
    %77 = math.exp %76 : vector<1x16x128xf32>
    %78 = arith.mulf %77, %31 : vector<1x16x128xf32>
    %79 = math.exp %78 : vector<1x16x128xf32>
    %cst_61 = arith.constant dense<0.000000e+00> : vector<1x128xf32>
    %80 = vector.multi_reduction <add>, %79, %cst_61 [1] : vector<1x16x128xf32> to vector<1x128xf32>
    %81 = vector.shape_cast %80 : vector<1x128xf32> to vector<1x1x128xf32>
    %82 = arith.mulf %79, %0 : vector<1x16x128xf32>
    %cst_62 = arith.constant dense<0.000000e+00> : vector<1x128xf32>
    %83 = vector.multi_reduction <add>, %82, %cst_62 [1] : vector<1x16x128xf32> to vector<1x128xf32>
    %84 = vector.shape_cast %83 : vector<1x128xf32> to vector<1x1x128xf32>
    %85 = tpu.reciprocal %81 {approx = true} : vector<1x1x128xf32> -> vector<1x1x128xf32>
    %86 = arith.mulf %84, %85 : vector<1x1x128xf32>
    %c0_63 = arith.constant 0 : index
    %c3_64 = arith.constant 3 : index
    %c0_65 = arith.constant 0 : index
    %87 = vector.load %arg4[%c0_63, %c3_64, %c0_65] : memref<1x4x128xf32, #tpu.memory_space<vmem>>, vector<1x1x128xf32>
    tpu.vector_store %arg4[%c0_63, %c3_64, %c0_65], %86 {strides = array<i32>} : memref<1x4x128xf32, #tpu.memory_space<vmem>>, vector<1x1x128xf32>,
    return
  }
  func.func @transform_0(%arg0: i32, %arg1: i32) -> (i32, i32, i32, i32) {
    %c0_i32 = arith.constant 0 : i32
    %c0_i32_0 = arith.constant 0 : i32
    %c0_i32_1 = arith.constant 0 : i32
    return %arg0, %c0_i32, %c0_i32_0, %arg1 : i32, i32, i32, i32
  }
  func.func @transform_1(%arg0: i32, %arg1: i32) -> (i32, i32, i32) {
    %c0_i32 = arith.constant 0 : i32
    %c0_i32_0 = arith.constant 0 : i32
    return %arg0, %c0_i32, %arg1 : i32, i32, i32
  }
  func.func @transform_2(%arg0: i32, %arg1: i32) -> (i32, i32, i32) {
    %c0_i32 = arith.constant 0 : i32
    %c0_i32_0 = arith.constant 0 : i32
    return %arg0, %c0_i32, %arg1 : i32, i32, i32
  }
}

</mosaic_0001>

<llo_original>
// kernel: dice_loss.1
$region0: #{dice_loss.1}
  #allocation0 [shape = 'u32[]', space=smem, size = 0x4, offset = 0x4, fixed_abs, tag = 'smem constant byte address 0x4 - core index']
  #allocation1 [shape = 'u32[144,128]{1,0:T(1,128)}', space=vmem, size = 0x12000, scoped, tag = 'internal scratch']
  %s0 = inlined_call_operand.vmem [shape: f32[2,4,16,128], index: 0, kind: input, shape index: {}]
  %s1 = inlined_call_operand.vmem [shape: f32[2,16,128], index: 1, kind: input, shape index: {}]
  %s2 = inlined_call_operand.vmem [shape: f32[2,4,128], index: 2, kind: output, shape index: {}]
  %s3 = sld [smem:[#allocation0]]
  $region41: #{dice_loss.1} parent=0
    _
  %s5 = ssub.s32 1, %s3
  %s6 = scalar_select 0, %s5, %s3
  loop: start=0, step=1, limit=4
  $region2: #{dice_loss.1} parent=0 // loop_pre_header
    _
  $region3: #{dice_loss.1} parent=0 // loop_header
    %s8 = sphi 0, %s12
    %p9 = scmp.ge.s32.totalorder %s8, 4
    %s15 = sphi 0, %s27
    %s16 = sphi 0, %s23
    %s17 = sphi 0, %s15
    %s18 = sphi 0, %s16
    %s19 = sphi 0, %s17
    %s20 = sphi 0, %s18
    %s32 = sphi 0, %s34
    %s35 = sphi 0, %s32
    %s36 = sphi 0, %s35
    %s52 = sphi 0, %s36
    %s60 = sphi 0, %s62
    %s63 = sphi 0, %s60
    %s64 = sphi 0, %s63
    %s80 = sphi 0, %s64
    %s88 = sphi 0, %s90
    %s91 = sphi 0, %s88
    %s92 = sphi 0, %s91
    %s108 = sphi 0, %s92
  $region4: #{dice_loss.1} parent=0 // loop_header_branch
    %11 = sbr.rel (%p9) target = $region8
  $region5: #{dice_loss.1} parent=0 // loop_body
    %s13 = ssub.s32 %s8, 1
    %s14 = ssub.s32 %s8, 2
    %s21 = sadd.s32 1, %s16
    %p22 = scmp.ge.s32.totalorder %s21, 1
    %s23 = scalar_select %p22, 0, %s21
    %s24 = sadd.s32 1, %s15
    %s25 = scalar_select %p22, %s24, %s15
    %p26 = scmp.ge.s32.totalorder %s25, 2
    %s27 = scalar_select %p26, 0, %s25
    %s28 = ssub.s32 %s15, %s27
    %s29 = ssub.s32 %s16, %s23
    %s30 = sor.u32 %s28, %s29
    %p31 = scmp.eq.s32.totalorder %s30, 0
    %s33 = sadd.s32 %s32, 1
    %s34 = scalar_select %p31, %s32, %s33
    %p37 = pneg %p31
    %p38 = scmp.eq.s32.totalorder %s8, 1
    %p39 = por %p37, %p38
    %p40 = scmp.ne.s32.totalorder %s32, %s35
    %p41 = scmp.eq.s32.totalorder %s8, 0
    %p42 = por %p40, %p41
    %p43 = scmp.ne.s32.totalorder %s32, %s35
    %p44 = scmp.eq.s32.totalorder %s13, 1
    %p45 = por %p43, %p44
    %p46 = scmp.ne.s32.totalorder %s35, %s36
    %p47 = scmp.eq.s32.totalorder %s13, 0
    %p48 = por %p46, %p47
    %p49 = scmp.ne.s32.totalorder %s35, %s36
    %p50 = scmp.eq.s32.totalorder %s14, 1
    %p51 = por %p49, %p50
    %p53 = scmp.ne.s32.totalorder %s36, %s52
    %p54 = scmp.eq.s32.totalorder %s14, 0
    %p55 = por %p53, %p54
    %s56 = ssub.s32 %s15, %s27
    %s57 = ssub.s32 %s16, %s23
    %s58 = sor.u32 %s56, %s57
    %p59 = scmp.eq.s32.totalorder %s58, 0
    %s61 = sadd.s32 %s60, 1
    %s62 = scalar_select %p59, %s60, %s61
    %p65 = pneg %p59
    %p66 = scmp.eq.s32.totalorder %s8, 1
    %p67 = por %p65, %p66
    %p68 = scmp.ne.s32.totalorder %s60, %s63
    %p69 = scmp.eq.s32.totalorder %s8, 0
    %p70 = por %p68, %p69
    %p71 = scmp.ne.s32.totalorder %s60, %s63
    %p72 = scmp.eq.s32.totalorder %s13, 1
    %p73 = por %p71, %p72
    %p74 = scmp.ne.s32.totalorder %s63, %s64
    %p75 = scmp.eq.s32.totalorder %s13, 0
    %p76 = por %p74, %p75
    %p77 = scmp.ne.s32.totalorder %s63, %s64
    %p78 = scmp.eq.s32.totalorder %s14, 1
    %p79 = por %p77, %p78
    %p81 = scmp.ne.s32.totalorder %s64, %s80
    %p82 = scmp.eq.s32.totalorder %s14, 0
    %p83 = por %p81, %p82
    %s84 = ssub.s32 %s15, %s27
    %s85 = ssub.s32 %s16, %s23
    %s86 = sor.u32 %s84, %s85
    %p87 = scmp.eq.s32.totalorder %s86, 0
    %s89 = sadd.s32 %s88, 1
    %s90 = scalar_select %p87, %s88, %s89
    %p93 = pneg %p87
    %p94 = scmp.eq.s32.totalorder %s8, 1
    %p95 = por %p93, %p94
    %p96 = scmp.ne.s32.totalorder %s88, %s91
    %p97 = scmp.eq.s32.totalorder %s8, 0
    %p98 = por %p96, %p97
    %p99 = scmp.ne.s32.totalorder %s88, %s91
    %p100 = scmp.eq.s32.totalorder %s13, 1
    %p101 = por %p99, %p100
    %p102 = scmp.ne.s32.totalorder %s91, %s92
    %p103 = scmp.eq.s32.totalorder %s13, 0
    %p104 = por %p102, %p103
    %p105 = scmp.ne.s32.totalorder %s91, %s92
    %p106 = scmp.eq.s32.totalorder %s14, 1
    %p107 = por %p105, %p106
    %p109 = scmp.ne.s32.totalorder %s92, %s108
    %p110 = scmp.eq.s32.totalorder %s14, 0
    %p111 = por %p109, %p110
    %p112 = scmp.le.s32.totalorder 1, %s8
    %p113 = scmp.lt.s32.totalorder %s8, 3
    %p114 = pnand %p112, %p113
    %p115 = pneg %p114
    // Predicated region
    $region9: #{dice_loss.1} parent=5 // pred_check
      _
    $region10: #{dice_loss.1} parent=5 // pred_check_branch
      %117 = sbr.rel (%p114) target = $region12
    $region11: #{dice_loss.1} parent=5 // pred_region
      %s118 = ssub.s32 %s8, 1
    $region12: #{dice_loss.1} parent=5 // pred_fallthru
      _
    %p119 = scmp.lt.s32.totalorder %s8, 2
    // Predicated region
    $region13: #{dice_loss.1} parent=5 // pred_check
      %p120 = pneg %p119
    $region14: #{dice_loss.1} parent=5 // pred_check_branch
      %122 = sbr.rel (%p120) target = $region16
    $region15: #{dice_loss.1} parent=5 // pred_region
      // Predicated region
      $region17: #{dice_loss.1} parent=15 // pred_check
        %p123 = pneg %p42
      $region18: #{dice_loss.1} parent=15 // pred_check_branch
        %125 = sbr.rel (%p123) target = $region20
      $region19: #{dice_loss.1} parent=15 // pred_region
        %p126 = scmp.lt.s32.totalorder %s15, 1
        %s127 = scalar_select %p126, %s15, 1
        %p128 = scmp.lt.s32.totalorder %s16, 0
        %s129 = scalar_select %p128, %s16, 0
        %s130 = smul.addr %s127, 8
        %s131 = sadd.s32 %s129, %s130
        %s132 = smul.addr %s131, 8
        %s133 = scalar_lea.vmem %s0, %s132
      $region20: #{dice_loss.1} parent=15 // pred_fallthru
        _
      // Predicated region
      $region21: #{dice_loss.1} parent=15 // pred_check
        %p134 = pneg %p70
      $region22: #{dice_loss.1} parent=15 // pred_check_branch
        %136 = sbr.rel (%p134) target = $region24
      $region23: #{dice_loss.1} parent=15 // pred_region
        %p137 = scmp.lt.s32.totalorder %s15, 1
        %s138 = scalar_select %p137, %s15, 1
        %p139 = scmp.lt.s32.totalorder %s16, 0
        %s140 = scalar_select %p139, %s16, 0
        %s141 = smul.addr %s138, 2
        %s142 = sadd.s32 %s140, %s141
        %s143 = smul.addr %s142, 8
        %s144 = scalar_lea.vmem %s1, %s143
      $region24: #{dice_loss.1} parent=15 // pred_fallthru
        _
    $region16: #{dice_loss.1} parent=5 // pred_fallthru
      _
    %p145 = scmp.le.s32.totalorder 1, %s8
    %p146 = scmp.lt.s32.totalorder %s8, 3
    %p147 = pnand %p145, %p146
    %p148 = pneg %p147
    // Predicated region
    $region25: #{dice_loss.1} parent=5 // pred_check
      _
    $region26: #{dice_loss.1} parent=5 // pred_check_branch
      %150 = sbr.rel (%p147) target = $region28
    $region27: #{dice_loss.1} parent=5 // pred_region
      %s151 = ssub.s32 %s8, 1
      %p152 = scmp.lt.s32.totalorder %s17, 1
      %s153 = scalar_select %p152, %s17, 1
      %p154 = scmp.lt.s32.totalorder %s18, 0
      %s155 = scalar_select %p154, %s18, 0
      %s156 = smul.addr %s153, 8
      %s157 = sadd.s32 %s155, %s156
      %s158 = smul.addr %s157, 8
      %s159 = scalar_lea.vmem %s0, %s158
      %p160 = pneg %p48
      %p161 = pneg %p45
      %p162 = scmp.lt.s32.totalorder %s17, 1
      %s163 = scalar_select %p162, %s17, 1
      %p164 = scmp.lt.s32.totalorder %s18, 0
      %s165 = scalar_select %p164, %s18, 0
      %s166 = smul.addr %s163, 2
      %s167 = sadd.s32 %s165, %s166
      %s168 = smul.addr %s167, 8
      %s169 = scalar_lea.vmem %s1, %s168
      %p170 = pneg %p76
      %p171 = pneg %p73
      %p172 = pneg %p104
      %p173 = pneg %p101
      %p174 = scmp.lt.s32.totalorder %s17, 1
      %s175 = scalar_select %p174, %s17, 1
      %p176 = scmp.lt.s32.totalorder %s18, 0
      %s177 = scalar_select %p176, %s18, 0
      %s178 = sadd.s32 %s177, %s175
      %s179 = smul.addr %s178, 4
      %s180 = scalar_lea.vmem %s2, %s179
      %p181 = scmp.lt.s32.totalorder %s17, 1
      %s182 = scalar_select %p181, %s17, 1
      %p183 = scmp.lt.s32.totalorder %s18, 0
      %s184 = scalar_select %p183, %s18, 0
      %s185 = smul.addr %s182, 8
      %s186 = sadd.s32 %s184, %s185
      %s187 = smul.addr %s186, 8
      %s188 = scalar_lea.vmem %s0, %s187
      %p189 = scmp.lt.s32.totalorder %s17, 1
      %s190 = scalar_select %p189, %s17, 1
      %p191 = scmp.lt.s32.totalorder %s18, 0
      %s192 = scalar_select %p191, %s18, 0
      %s193 = smul.addr %s190, 2
      %s194 = sadd.s32 %s192, %s193
      %s195 = smul.addr %s194, 8
      %s196 = scalar_lea.vmem %s1, %s195
      %p197 = scmp.lt.s32.totalorder %s17, 1
      %s198 = scalar_select %p197, %s17, 1
      %p199 = scmp.lt.s32.totalorder %s18, 0
      %s200 = scalar_select %p199, %s18, 0
      %s201 = sadd.s32 %s200, %s198
      %s202 = smul.addr %s201, 4
      %s203 = scalar_lea.vmem %s2, %s202
      %v204 = vld [vmem:[%s196] sm:$0xff]
      %v205 = vld [vmem:[%s196 + $0x8] sm:$0xff]
      %v206 = vld [vmem:[%s188] sm:$0xff]
      %v207 = vld [vmem:[%s188 + $0x8] sm:$0xff]
      %s208 = scalar_lea.vmem %s188, 16
      %v209 = vld [vmem:[%s208] sm:$0xff]
      %v210 = vld [vmem:[%s208 + $0x8] sm:$0xff]
      %v211 = vmax.f32 %v206, %v209
      %v212 = vmax.f32 %v207, %v210
      %s213 = scalar_lea.vmem %s188, 32
      %v214 = vld [vmem:[%s213] sm:$0xff]
      %v215 = vld [vmem:[%s213 + $0x8] sm:$0xff]
      %v216 = vmax.f32 %v211, %v214
      %v217 = vmax.f32 %v212, %v215
      %s218 = scalar_lea.vmem %s188, 48
      %v219 = vld [vmem:[%s218] sm:$0xff]
      %v220 = vld [vmem:[%s218 + $0x8] sm:$0xff]
      %v221 = vmax.f32 %v216, %v219
      %v222 = vmax.f32 %v217, %v220
      %v223 = vsub.f32 %v206, %v221
      %v224 = vsub.f32 %v207, %v222
      %v225 = vmul.f32 %v223, 1.442695
      %v226 = vpow.pop %v225
      %v227 = vmul.f32 %v224, 1.442695
      %v228 = vpow.pop %v227
      %v229 = vsub.f32 %v209, %v221
      %v230 = vsub.f32 %v210, %v222
      %v231 = vmul.f32 %v229, 1.442695
      %v232 = vpow.pop %v231
      %v233 = vmul.f32 %v230, 1.442695
      %v234 = vpow.pop %v233
      %v235 = vadd.f32 %v226, %v232
      %v236 = vadd.f32 %v228, %v234
      %v237 = vsub.f32 %v214, %v221
      %v238 = vsub.f32 %v215, %v222
      %v239 = vmul.f32 %v237, 1.442695
      %v240 = vpow.pop %v239
      %v241 = vmul.f32 %v238, 1.442695
      %v242 = vpow.pop %v241
      %v243 = vadd.f32 %v235, %v240
      %v244 = vadd.f32 %v236, %v242
      %v245 = vsub.f32 %v219, %v221
      %v246 = vsub.f32 %v220, %v222
      %v247 = vmul.f32 %v245, 1.442695
      %v248 = vpow.pop %v247
      %v249 = vmul.f32 %v246, 1.442695
      %v250 = vpow.pop %v249
      %v251 = vadd.f32 %v243, %v248
      %v252 = vadd.f32 %v244, %v250
      %v253 = vrcp.pop %v251
      %v254 = vrcp.pop %v252
      %v255 = vmul.f32 %v226, %v253
      %v256 = vmul.f32 %v228, %v254
      %v257 = vmul.f32 %v255, 1.442695
      %v258 = vpow.pop %v257
      %v259 = vmul.f32 %v256, 1.442695
      %v260 = vpow.pop %v259
      %v261 = vadd.f32 %v258, %v260
      %v262 = vrot.slane %v261, 4
      %v263 = vadd.f32 %v261, %v262
      %v264 = vrot.slane %v263, 2
      %v265 = vadd.f32 %v263, %v264
      %v266 = vrot.slane %v265, 1
      %v267 = vadd.f32 %v265, %v266
      %v268 = vmul.f32 %v258, %v204
      %v269 = vmul.f32 %v260, %v205
      %v270 = vadd.f32 %v268, %v269
      %v271 = vrot.slane %v270, 4
      %v272 = vadd.f32 %v270, %v271
      %v273 = vrot.slane %v272, 2
      %v274 = vadd.f32 %v272, %v273
      %v275 = vrot.slane %v274, 1
      %v276 = vadd.f32 %v274, %v275
      %v277 = vrcp.pop %v267
      %v278 = vmul.f32 %v276, %v277
      %279 = vst [vmem:[%s203] sm:$0x1] %v278
      %v280 = vld [vmem:[%s208] sm:$0xff]
      %v281 = vld [vmem:[%s208 + $0x8] sm:$0xff]
      %v282 = vsub.f32 %v280, %v221
      %v283 = vsub.f32 %v281, %v222
      %v284 = vmul.f32 %v282, 1.442695
      %v285 = vpow.pop %v284
      %v286 = vmul.f32 %v283, 1.442695
      %v287 = vpow.pop %v286
      %v288 = vmul.f32 %v285, %v253
      %v289 = vmul.f32 %v287, %v254
      %v290 = vmul.f32 %v288, 1.442695
      %v291 = vpow.pop %v290
      %v292 = vmul.f32 %v289, 1.442695
      %v293 = vpow.pop %v292
      %v294 = vadd.f32 %v291, %v293
      %v295 = vrot.slane %v294, 4
      %v296 = vadd.f32 %v294, %v295
      %v297 = vrot.slane %v296, 2
      %v298 = vadd.f32 %v296, %v297
      %v299 = vrot.slane %v298, 1
      %v300 = vadd.f32 %v298, %v299
      %v301 = vmul.f32 %v291, %v204
      %v302 = vmul.f32 %v293, %v205
      %v303 = vadd.f32 %v301, %v302
      %v304 = vrot.slane %v303, 4
      %v305 = vadd.f32 %v303, %v304
      %v306 = vrot.slane %v305, 2
      %v307 = vadd.f32 %v305, %v306
      %v308 = vrot.slane %v307, 1
      %v309 = vadd.f32 %v307, %v308
      %v310 = vrcp.pop %v300
      %v311 = vmul.f32 %v309, %v310
      %312 = vst [vmem:[%s203 + $0x1] sm:$0x1] %v311
      %v313 = vld [vmem:[%s213] sm:$0xff]
      %v314 = vld [vmem:[%s213 + $0x8] sm:$0xff]
      %v315 = vsub.f32 %v313, %v221
      %v316 = vsub.f32 %v314, %v222
      %v317 = vmul.f32 %v315, 1.442695
      %v318 = vpow.pop %v317
      %v319 = vmul.f32 %v316, 1.442695
      %v320 = vpow.pop %v319
      %v321 = vmul.f32 %v318, %v253
      %v322 = vmul.f32 %v320, %v254
      %v323 = vmul.f32 %v321, 1.442695
      %v324 = vpow.pop %v323
      %v325 = vmul.f32 %v322, 1.442695
      %v326 = vpow.pop %v325
      %v327 = vadd.f32 %v324, %v326
      %v328 = vrot.slane %v327, 4
      %v329 = vadd.f32 %v327, %v328
      %v330 = vrot.slane %v329, 2
      %v331 = vadd.f32 %v329, %v330
      %v332 = vrot.slane %v331, 1
      %v333 = vadd.f32 %v331, %v332
      %v334 = vmul.f32 %v324, %v204
      %v335 = vmul.f32 %v326, %v205
      %v336 = vadd.f32 %v334, %v335
      %v337 = vrot.slane %v336, 4
      %v338 = vadd.f32 %v336, %v337
      %v339 = vrot.slane %v338, 2
      %v340 = vadd.f32 %v338, %v339
      %v341 = vrot.slane %v340, 1
      %v342 = vadd.f32 %v340, %v341
      %v343 = vrcp.pop %v333
      %v344 = vmul.f32 %v342, %v343
      %345 = vst [vmem:[%s203 + $0x2] sm:$0x1] %v344
      %v346 = vld [vmem:[%s218] sm:$0xff]
      %v347 = vld [vmem:[%s218 + $0x8] sm:$0xff]
      %v348 = vsub.f32 %v346, %v221
      %v349 = vsub.f32 %v347, %v222
      %v350 = vmul.f32 %v348, 1.442695
      %v351 = vpow.pop %v350
      %v352 = vmul.f32 %v349, 1.442695
      %v353 = vpow.pop %v352
      %v354 = vmul.f32 %v351, %v253
      %v355 = vmul.f32 %v353, %v254
      %v356 = vmul.f32 %v354, 1.442695
      %v357 = vpow.pop %v356
      %v358 = vmul.f32 %v355, 1.442695
      %v359 = vpow.pop %v358
      %v360 = vadd.f32 %v357, %v359
      %v361 = vrot.slane %v360, 4
      %v362 = vadd.f32 %v360, %v361
      %v363 = vrot.slane %v362, 2
      %v364 = vadd.f32 %v362, %v363
      %v365 = vrot.slane %v364, 1
      %v366 = vadd.f32 %v364, %v365
      %v367 = vmul.f32 %v357, %v204
      %v368 = vmul.f32 %v359, %v205
      %v369 = vadd.f32 %v367, %v368
      %v370 = vrot.slane %v369, 4
      %v371 = vadd.f32 %v369, %v370
      %v372 = vrot.slane %v371, 2
      %v373 = vadd.f32 %v371, %v372
      %v374 = vrot.slane %v373, 1
      %v375 = vadd.f32 %v373, %v374
      %v376 = vrcp.pop %v366
      %v377 = vmul.f32 %v375, %v376
      %378 = vst [vmem:[%s203 + $0x3] sm:$0x1] %v377
      %p379 = scmp.lt.s32.totalorder %s17, 1
      %s380 = scalar_select %p379, %s17, 1
      %p381 = scmp.lt.s32.totalorder %s18, 0
      %s382 = scalar_select %p381, %s18, 0
      %s383 = sadd.s32 %s382, %s380
      %s384 = smul.addr %s383, 4
      %s385 = scalar_lea.vmem %s2, %s384
      // Predicated region
      $region29: #{dice_loss.1} parent=27 // pred_check
        %p386 = pneg %p101
      $region30: #{dice_loss.1} parent=27 // pred_check_branch
        %388 = sbr.rel (%p386) target = $region32
      $region31: #{dice_loss.1} parent=27 // pred_region
        _
      $region32: #{dice_loss.1} parent=27 // pred_fallthru
        _
    $region28: #{dice_loss.1} parent=5 // pred_fallthru
      _
    %p389 = scmp.le.s32.totalorder 2, %s8
    // Predicated region
    $region33: #{dice_loss.1} parent=5 // pred_check
      %p390 = pneg %p389
    $region34: #{dice_loss.1} parent=5 // pred_check_branch
      %392 = sbr.rel (%p390) target = $region36
    $region35: #{dice_loss.1} parent=5 // pred_region
      %s393 = ssub.s32 %s8, 2
      // Predicated region
      $region37: #{dice_loss.1} parent=35 // pred_check
        %p394 = pneg %p107
      $region38: #{dice_loss.1} parent=35 // pred_check_branch
        %396 = sbr.rel (%p394) target = $region40
      $region39: #{dice_loss.1} parent=35 // pred_region
        %p397 = scmp.lt.s32.totalorder %s19, 1
        %s398 = scalar_select %p397, %s19, 1
        %p399 = scmp.lt.s32.totalorder %s20, 0
        %s400 = scalar_select %p399, %s20, 0
        %s401 = sadd.s32 %s400, %s398
        %s402 = smul.addr %s401, 4
        %s403 = scalar_lea.vmem %s2, %s402
      $region40: #{dice_loss.1} parent=35 // pred_fallthru
        _
    $region36: #{dice_loss.1} parent=5 // pred_fallthru
      _
  $region6: #{dice_loss.1} parent=0 // loop_footer
    %s12 = sadd.s32 1, %s8
  $region7: #{dice_loss.1} parent=0 // loop_footer_branch
    %7 = sbr.rel target = $region3
  $region8: #{dice_loss.1} parent=0 // loop_exit
    _

</llo_original>
